<compile_context>
chip_gen: v7x
topology: tpu7x:2x2x1
jax: 0.10.0
libtpu: 0.0.40
codegen_flags: <defaults>
</compile_context>

<pallas_src>
import functools

import jax
import jax.numpy as jnp
from jax.experimental import pallas as pl
from jax.experimental.pallas import tpu as pltpu


def _round_up(v: int, m: int) -> int:
    return (v + m - 1) // m * m


def _num_tensorcores() -> int:
    """Best-effort TensorCores-per-chip (2 on v7x megacore, else 1)."""
    try:
        info = pltpu.get_tpu_info()
    except Exception:
        return 1
    for attr in ("num_cores", "num_tensorcores", "tensor_cores_per_chip",
                 "cores_per_chip", "num_tensor_cores"):
        v = getattr(info, attr, None)
        if isinstance(v, int) and v > 0:
            return v
    return 1


# -----------------------------------------------------------------------------
# Primary path: direct HBM -> HBM strided DMA (no VMEM round-trip).
# -----------------------------------------------------------------------------
def _chomp_dma_kernel(x_hbm, o_hbm, sem, *, l_out: int, n_per_step: int):
    b0 = pl.program_id(0) * n_per_step
    cp = pltpu.make_async_copy(
        x_hbm.at[pl.ds(b0, n_per_step), :, pl.ds(0, l_out)],
        o_hbm.at[pl.ds(b0, n_per_step), :, :],
        sem,
    )
    cp.start()
    cp.wait()


def _chomp_dma(x: jax.Array, l_out: int) -> jax.Array:
    n, c, _ = x.shape
    dtype_bytes = jnp.dtype(x.dtype).itemsize

    # v7x only: both TensorCores issue DMAs (a single TC's issue rate may not
    # saturate HBM). v5e / v6e: single step -- splitting buys nothing.
    n_steps = 2 if (_num_tensorcores() >= 2 and n >= 2 and n % 2 == 0) else 1
    n_per_step = n // n_steps

    return pl.pallas_call(
        functools.partial(_chomp_dma_kernel, l_out=l_out, n_per_step=n_per_step),
        out_shape=jax.ShapeDtypeStruct((n, c, l_out), x.dtype),
        grid_spec=pltpu.PrefetchScalarGridSpec(
            num_scalar_prefetch=0,
            grid=(n_steps,),
            in_specs=[pl.BlockSpec(memory_space=pl.ANY)],
            out_specs=pl.BlockSpec(memory_space=pl.ANY),
            scratch_shapes=[pltpu.SemaphoreType.DMA(())],
        ),
        compiler_params=pltpu.CompilerParams(
            dimension_semantics=(("parallel",) if n_steps > 1 else ("arbitrary",)),
        ),
        cost_estimate=pl.CostEstimate(
            flops=0,
            transcendentals=0,
            bytes_accessed=2 * n * c * l_out * dtype_bytes,
        ),
    )(x)


# -----------------------------------------------------------------------------
# Fallback path for tiny rows (< 512 B of payload per row): lane-dense tiled
# VMEM copy where strided-DMA efficiency would be poor.
# -----------------------------------------------------------------------------
def _copy_kernel(x_ref, o_ref):
    # Same-shaped input/output blocks: straight vld/vst copy, no in-body slice.
    o_ref[...] = x_ref[...]


def _chomp_tiled(x: jax.Array, l_out: int) -> jax.Array:
    n, c, l = x.shape
    rows = n * c
    dtype_bytes = jnp.dtype(x.dtype).itemsize
    # Sub-32-bit dtypes pack along sublanes: 8 (f32/i32), 16 (bf16), 32 (i8).
    sublane_pack = max(1, 4 // dtype_bytes) * 8

    # Balanced lane tiles: multiples of 128, <= 2048, near-equal sizes so there
    # is never a nearly-empty masked trailing block.
    lanes = _round_up(l_out, 128)
    n_lane_blocks = pl.cdiv(lanes, 2048)
    l_tile = _round_up(pl.cdiv(lanes, n_lane_blocks), 128)

    # Row tile: multiple of sublane_pack; double-buffered in+out (~4x tile) is
    # <= 8 MiB, safe vs v5e's 16 MiB scoped default and v7x's 64 MiB VMEM.
    budget_bytes = 2 * 1024 * 1024
    r_tile = (budget_bytes // (l_tile * dtype_bytes)) // sublane_pack * sublane_pack
    r_tile = max(sublane_pack, min(r_tile, _round_up(rows, sublane_pack)))

    # Megacore only: force >= 2 row blocks so both TCs get work. Gated on the
    # core count -- on 1-TC chips this would just add a grid step.
    if (_num_tensorcores() >= 2 and rows > sublane_pack
            and pl.cdiv(rows, r_tile) < 2):
        r_tile = max(sublane_pack, _round_up(pl.cdiv(rows, 2), sublane_pack))

    x2d = x.reshape(rows, l)  # merge leading dims
    grid = (pl.cdiv(rows, r_tile), pl.cdiv(l_out, l_tile))

    out2d = pl.pallas_call(
        _copy_kernel,
        out_shape=jax.ShapeDtypeStruct((rows, l_out), x.dtype),
        grid_spec=pltpu.PrefetchScalarGridSpec(
            num_scalar_prefetch=0,
            grid=grid,
            # Only lane blocks covering [0, l_out) are fetched; the chomped
            # tail never leaves HBM (modulo <= 127 lanes of rounding). Default
            # pipeline depth 2; pl.Buffered(3) only pays off if profiling shows
            # exposed DMA gaps on many-small-step grids.
            in_specs=[pl.BlockSpec((r_tile, l_tile), lambda i, j: (i, j))],
            out_specs=pl.BlockSpec((r_tile, l_tile), lambda i, j: (i, j)),
        ),
        compiler_params=pltpu.CompilerParams(
            dimension_semantics=("parallel", "parallel"),
        ),
        cost_estimate=pl.CostEstimate(
            flops=0,
            transcendentals=0,
            bytes_accessed=2 * rows * l_out * dtype_bytes,
        ),
    )(x2d)
    return out2d.reshape(n, c, l_out)


def chomp1d(x: jax.Array, chomp_size: int) -> jax.Array:
    """Pallas equivalent of Chomp1d.forward for (N, C, L) inputs."""
    if chomp_size <= 0:
        return x
    n, c, l = x.shape
    l_out = l - chomp_size
    if l_out <= 0:
        # Match PyTorch: x[:, :, :-k] with k >= L is an empty tensor.
        return x[:, :, :0]

    dtype_bytes = jnp.dtype(x.dtype).itemsize
    if l_out * dtype_bytes < 512:
        # Rows too small for an efficient strided DMA: lane-dense tiled copy.
        return _chomp_tiled(x, l_out)
    return _chomp_dma(x, l_out)


if __name__ == "__main__":
    key = jax.random.PRNGKey(0)

    # Small TCN-like activation: (batch=2, channels=4, L=16), chomp 3
    # (exercises the tiny-row tiled fallback path).
    N, C, L = 2, 4, 16
    CHOMP = 3
    x = jax.random.normal(key, (N, C, L), dtype=jnp.float32)
    out = jax.block_until_ready(chomp1d(x, CHOMP))
    ref = x[:, :, :-CHOMP]
    assert out.shape == (N, C, L - CHOMP), out.shape
    assert out.dtype == x.dtype
    assert jnp.array_equal(out, ref), "mismatch vs reference slice (f32 tiled)"

    # chomp_size == 0 -> identity.
    out0 = jax.block_until_ready(chomp1d(x, 0))
    assert jnp.array_equal(out0, x)

    # bf16, >= 512 B per row -> direct HBM->HBM DMA path (128-aligned width).
    x2 = jax.random.normal(jax.random.PRNGKey(1), (2, 8, 300), dtype=jnp.bfloat16)
    out2 = jax.block_until_ready(chomp1d(x2, 44))
    ref2 = x2[:, :, :-44]
    assert out2.shape == (2, 8, 256), out2.shape
    assert out2.dtype == x2.dtype
    assert jnp.array_equal(out2, ref2), "mismatch vs reference slice (bf16 DMA)"

    # f32 DMA path with a non-128-multiple kept width.
    x3 = jax.random.normal(jax.random.PRNGKey(2), (2, 4, 200), dtype=jnp.float32)
    out3 = jax.block_until_ready(chomp1d(x3, 8))
    assert out3.shape == (2, 4, 192), out3.shape
    assert jnp.array_equal(out3, x3[:, :, :-8]), "mismatch vs reference slice (f32 DMA)"

    # chomp_size >= L matches PyTorch's empty-tensor behavior.
    out_empty = jax.block_until_ready(chomp1d(x, L))
    assert out_empty.shape == (N, C, 0), out_empty.shape

    print("KERNEL_OK")
</pallas_src>

<mosaic_0001>
module attributes {stable_mosaic.version = 11 : i64} {
  func.func @_copy_kernel(%arg0: i32, %arg1: i32, %arg2: memref<8x128xf32, #tpu.memory_space<vmem>>, %arg3: memref<8x128xf32, #tpu.memory_space<vmem>>) attributes {dimension_semantics = [#tpu.dimension_semantics<parallel>, #tpu.dimension_semantics<parallel>], iteration_bounds = array<i64: 1, 1>, scalar_prefetch = 0 : i64, scratch_operands = 0 : i64, tpu.core_type = #tpu.core_type<tc>, window_params = [{transform_indices = @transform_0, window_bounds = array<i64: 8, 128>}, {transform_indices = @transform_1, window_bounds = array<i64: 8, 128>}]} {
    %c0 = arith.constant 0 : index
    %c0_0 = arith.constant 0 : index
    %0 = vector.load %arg2[%c0, %c0_0] : memref<8x128xf32, #tpu.memory_space<vmem>>, vector<8x128xf32>
    %c0_1 = arith.constant 0 : index
    %c0_2 = arith.constant 0 : index
    %1 = vector.load %arg3[%c0_1, %c0_2] : memref<8x128xf32, #tpu.memory_space<vmem>>, vector<8x128xf32>
    tpu.vector_store %arg3[%c0_1, %c0_2], %0 {strides = array<i32>} : memref<8x128xf32, #tpu.memory_space<vmem>>, vector<8x128xf32>,
    return
  }
  func.func @transform_0(%arg0: i32, %arg1: i32) -> (i32, i32) {
    %c0_i32 = arith.constant 0 : i32
    return %arg0, %arg1 : i32, i32
  }
  func.func @transform_1(%arg0: i32, %arg1: i32) -> (i32, i32) {
    %c0_i32 = arith.constant 0 : i32
    return %arg0, %arg1 : i32, i32
  }
}

</mosaic_0001>

<llo_original>
// kernel: tpu_custom_call.1
$region0: #{tpu_custom_call.1}
  #allocation0 [shape = 'u32[]', space=smem, size = 0x4, offset = 0x4, fixed_abs, tag = 'smem constant byte address 0x4 - core index']
  #allocation1 [shape = 'u32[144,128]{1,0:T(1,128)}', space=vmem, size = 0x12000, scoped, tag = 'internal scratch']
  %s0 = inlined_call_operand.hbm [shape: f32[8,16], index: 0, kind: input, shape index: {}]
  %s1 = inlined_call_operand.hbm [shape: f32[8,13], index: 1, kind: output, shape index: {}]
  %s2 = sld [smem:[#allocation0]]
  $region18: #{tpu_custom_call.1} parent=0
    _
  %s4 = ssub.s32 1, %s2
  %s5 = scalar_select 0, %s4, %s2
  $region1: #{tpu_custom_call.1} parent=0
    #allocation2 [shape = 'u8[4096]{0}', space=vmem, size = 0x1000, scoped, tag = 'input window, operand 0, single buffered']
    #allocation3 [shape = 's32[1]{0}', space=sflag, size = 0x4, scoped, tag = 'scoped memory for tpu_custom_call.1']
    #allocation4 [shape = 's32[1]{0}', space=sflag, size = 0x4, scoped, tag = 'scoped memory for tpu_custom_call.1']
    #allocation5 [shape = 'u8[4096]{0}', space=vmem, size = 0x1000, scoped, tag = 'output window, operand 0, single buffered']
    %6 = vsyncpa [#allocation3], 0
    %7 = vsyncpa [#allocation4], 0
    // Predicated region
    $region2: #{tpu_custom_call.1} parent=1 // pred_check
      _
    $region3: #{tpu_custom_call.1} parent=1 // pred_check_branch
      %9 = sbr.rel (0) target = $region5
    $region4: #{tpu_custom_call.1} parent=1 // pred_region
      %s11 = ssub.s32 128, 128
      %12 = vsyncadd [#allocation3], %s11
      %s14 = sshll.u32 [#allocation2], 4
      %s15 = int_to_ptr.vmem [resolvable:$true] %s14
      %17 = dma.hbm_to_vmem [thread:$0]  %s0, 128, %s15, [#allocation3]
    $region5: #{tpu_custom_call.1} parent=1 // pred_fallthru
      _
    // Predicated region
    $region6: #{tpu_custom_call.1} parent=1 // pred_check
      _
    $region7: #{tpu_custom_call.1} parent=1 // pred_check_branch
      %19 = sbr.rel (0) target = $region9
    $region8: #{tpu_custom_call.1} parent=1 // pred_region
      %20 = dma.done [#allocation3], 128
    $region9: #{tpu_custom_call.1} parent=1 // pred_fallthru
      _
    %v21 = vld [vmem:[#allocation2] sm:$0xff]
    %22 = vst [vmem:[#allocation5] sm:$0xff] %v21
    // Predicated region
    $region10: #{tpu_custom_call.1} parent=1 // pred_check
      _
    $region11: #{tpu_custom_call.1} parent=1 // pred_check_branch
      %24 = sbr.rel (0) target = $region13
    $region12: #{tpu_custom_call.1} parent=1 // pred_region
      %s26 = ssub.s32 128, 128
      %27 = vsyncadd [#allocation4], %s26
      %s29 = sshll.u32 [#allocation5], 4
      %s30 = int_to_ptr.vmem [resolvable:$true] %s29
      %32 = dma.vmem_to_hbm [thread:$0]  %s30, 128, %s1, [#allocation4]
    $region13: #{tpu_custom_call.1} parent=1 // pred_fallthru
      _
    // Predicated region
    $region14: #{tpu_custom_call.1} parent=1 // pred_check
      _
    $region15: #{tpu_custom_call.1} parent=1 // pred_check_branch
      %34 = sbr.rel (0) target = $region17
    $region16: #{tpu_custom_call.1} parent=1 // pred_region
      %35 = dma.done [#allocation4], 128
    $region17: #{tpu_custom_call.1} parent=1 // pred_fallthru
      _
    %36 = vsyncpa [#allocation3], 1
    %37 = vsyncpa [#allocation4], 1

</llo_original>
